<compile_context>
chip_gen: v7x
topology: tpu7x:2x2x1
jax: 0.10.0
libtpu: 0.0.40
codegen_flags: <defaults>
</compile_context>

<pallas_src>
import functools
import math

import jax
import jax.numpy as jnp
from jax.experimental import pallas as pl
from jax.experimental.pallas import tpu as pltpu


def _reference(k, q_param, wk_t, bk, wq_t, bq, wp_t, bp):
    """Plain-JAX reference reproducing the PyTorch forward (n_head=1, dot_product)."""
    B = k.shape[0]
    q = jnp.broadcast_to(q_param[None], (B,) + q_param.shape)
    kx = jnp.einsum('bke,eh->bkh', k, wk_t) + bk[0]
    qx = jnp.einsum('bqe,eh->bqh', q, wq_t) + bq[0]
    s = jnp.einsum('bqh,bkh->bqk', qx, kx)
    score = jax.nn.softmax(s, axis=-1)
    out = jnp.einsum('bqk,bkh->bqh', score, kx)
    out = jnp.einsum('bqh,ho->bqo', out, wp_t) + bp[0]
    return out, score


def _noquery_attn_kernel(k_ref, qx_ref, wk_ref, bk_ref, wp_ref, bp_ref,
                         out_ref, score_ref=None, *, bt, kl, ql):
    # Key projection: one large-M MXU matmul over the whole batch group.
    # k_ref block: (1, Bt*KL, E) (possibly bf16); accumulate in f32.
    kx = jnp.dot(k_ref[0], wk_ref[...], preferred_element_type=jnp.float32)
    kx = kx + bk_ref[...]                                           # (Bt*KL, H) f32
    h = kx.shape[-1]
    kx3 = kx.reshape(bt, kl, h)                                     # (Bt, KL, H)
    qx = qx_ref[...]                                                # (QL, H) f32

    if ql == 1:
        # Score on the VPU (mul) + XLU (lane reduce over H): a (1,H)@(H,KL) MXU
        # matmul would waste nearly all MXU rows, and these slots overlap with the
        # projection matmul of the next grid step.
        s = jnp.sum(kx3 * qx, axis=-1)                              # (Bt, KL)
        s_max = jnp.max(s, axis=-1, keepdims=True)
        e = jnp.exp(s - s_max)
        denom = jnp.sum(e, axis=-1, keepdims=True)
        inv = pl.reciprocal(denom, approx=True)                     # EUP vrcp
        inv = inv * (2.0 - denom * inv)                             # one Newton step
        attn2 = e * inv                                             # (Bt, KL)
        attn3 = attn2.reshape(bt, 1, kl)
    else:
        # Generic q_len path (not exercised by NoQueryAttention defaults, q_len=1).
        qx3 = jnp.broadcast_to(qx[None], (bt, ql, h))
        s = jnp.einsum('bqh,bkh->bqk', qx3, kx3,
                       preferred_element_type=jnp.float32)          # (Bt, QL, KL)
        s_max = jnp.max(s, axis=-1, keepdims=True)
        e = jnp.exp(s - s_max)
        denom = jnp.sum(e, axis=-1, keepdims=True)
        inv = pl.reciprocal(denom, approx=True)
        inv = inv * (2.0 - denom * inv)
        attn3 = e * inv                                             # (Bt, QL, KL)
        attn2 = attn3.reshape(bt * ql, kl)

    # Weighted sum of values (kx doubles as the value tensor), then output proj.
    ctx = jnp.einsum('bqk,bkh->bqh', attn3, kx3,
                     preferred_element_type=jnp.float32)            # (Bt, QL, H)
    ctx2 = ctx.reshape(bt * ql, h)
    out = jnp.dot(ctx2.astype(wp_ref.dtype), wp_ref[...],
                  preferred_element_type=jnp.float32) + bp_ref[...] # (Bt*QL, O)

    out_ref[0] = out.astype(out_ref.dtype)
    if score_ref is not None:
        score_ref[0] = attn2.astype(score_ref.dtype)


def _vmem_model_bytes(bt, *, KL, E, H, O, QL, in_dsize, return_score):
    """Per-step VMEM estimate: double-buffered in/out tiles + double-buffered
    constant operands + f32 temporaries (kx, mul temp, s/e/attn, ctx, out)."""
    k_tile = bt * KL * E * in_dsize
    out_tile = bt * QL * O * 4
    score_tile = bt * QL * KL * 4 if return_score else 0
    consts = (E * H + H * O) * in_dsize + (QL * H + H + O) * 4
    temps = (2 * bt * KL * H + 3 * bt * QL * KL + bt * QL * H + bt * QL * O) * 4
    return 2 * (k_tile + out_tile + score_tile + consts) + temps


def _choose_bt(B, KL, E, H, O, QL, *, in_dsize, return_score,
               vmem_budget_bytes, target_rows=2048, min_grid_steps=1):
    """Largest divisor Bt of B whose working set fits the VMEM budget and whose
    projection matmul has <= target_rows rows.  If possible keep >= min_grid_steps
    grid steps (set 2 on 2-TensorCore parts like v7x; on single-TC v5e/v6e the grid
    is a serial loop, so splitting only adds per-step overhead)."""
    best_any, best_steps = 1, None
    for d in range(1, B + 1):
        if B % d:
            continue
        if d * KL > max(target_rows, KL):
            continue
        if _vmem_model_bytes(d, KL=KL, E=E, H=H, O=O, QL=QL, in_dsize=in_dsize,
                             return_score=return_score) > vmem_budget_bytes:
            continue
        best_any = d
        if B // d >= min_grid_steps:
            best_steps = d
    return best_steps if best_steps is not None else best_any


def _vmem_budget_and_limit():
    """Generation-aware VMEM budget / compiler limit derived from the actual part."""
    cap = 64 * 1024 * 1024                       # conservative default (v7x: 64 MiB/TC)
    try:
        cap = int(getattr(pltpu.get_tpu_info(), "vmem_capacity_bytes", cap))
    except Exception:
        pass
    budget = min((cap * 5) // 8, 64 * 1024 * 1024)   # 128 MiB parts -> 64 MiB, v7x -> 40 MiB
    limit = min(budget + 24 * 1024 * 1024, cap - 8 * 1024 * 1024)
    return budget, limit


def noquery_attention(k, q_param, wk_t, bk, wq_t, bq, wp_t, bp, *,
                      return_score=False, compute_dtype=jnp.bfloat16,
                      min_grid_steps=1, prefer_xla_below_bytes=256 * 1024):
    """
    Forward pass of NoQueryAttention (n_head=1, score_function='dot_product').

    k:       (B, KL, E) float32
    q_param: (QL, E)    learned query parameter
    wk_t:    (E, H)  = w_k.weight.T ; bk: (1, H)
    wq_t:    (E, H)  = w_q.weight.T ; bq: (1, H)
    wp_t:    (H, O)  = proj.weight.T; bp: (1, O)

    return_score=False skips the (B, QL, KL) score writeback (HBM traffic).
    compute_dtype=bfloat16 halves the dominant HBM stream (k) and uses the MXU bf16
    rate; softmax math stays f32.  Pass jnp.float32 for PyTorch-level numerics.
    min_grid_steps: set 2 on 2-TensorCore chips (v7x) so both cores get a step.
    """
    B, KL, E = k.shape
    QL = q_param.shape[0]
    H = wk_t.shape[1]
    O = wp_t.shape[1]

    # Tiny problems: the fixed pallas_call overhead dwarfs compute; let XLA fuse.
    if k.size * k.dtype.itemsize < prefer_xla_below_bytes:
        out, score = _reference(k, q_param, wk_t, bk, wq_t, bq, wp_t, bp)
        return (out, score) if return_score else out

    # Hoist the batch-independent query projection out of the kernel (f32, tiny).
    qx = (q_param @ wq_t + bq[0]).astype(jnp.float32)                # (QL, H)

    in_dsize = jnp.dtype(compute_dtype).itemsize
    vmem_budget, vmem_limit = _vmem_budget_and_limit()
    Bt = _choose_bt(B, KL, E, H, O, QL, in_dsize=in_dsize, return_score=return_score,
                    vmem_budget_bytes=vmem_budget, min_grid_steps=min_grid_steps)
    nsteps = B // Bt

    # Fold the per-step batch group into the matmul row (sublane) dim: one fat
    # (Bt*KL, E)@(E, H) MXU matmul and fat DMA tiles per grid step.
    k_folded = k.reshape(nsteps, Bt * KL, E).astype(compute_dtype)
    wk_c = wk_t.astype(compute_dtype)
    wp_c = wp_t.astype(compute_dtype)
    bk_f = bk.astype(jnp.float32)
    bp_f = bp.astype(jnp.float32)

    out_shapes = [jax.ShapeDtypeStruct((nsteps, Bt * QL, O), jnp.float32)]
    out_specs = [pl.BlockSpec((1, Bt * QL, O), lambda s: (s, 0, 0))]
    if return_score:
        out_shapes.append(jax.ShapeDtypeStruct((nsteps, Bt * QL, KL), jnp.float32))
        out_specs.append(pl.BlockSpec((1, Bt * QL, KL), lambda s: (s, 0, 0)))

    grid_spec = pltpu.PrefetchScalarGridSpec(
        num_scalar_prefetch=0,
        grid=(nsteps,),
        in_specs=[
            pl.BlockSpec((1, Bt * KL, E), lambda s: (s, 0, 0)),      # k group / step
            pl.BlockSpec((QL, H), lambda s: (0, 0)),                 # precomputed qx
            pl.BlockSpec((E, H), lambda s: (0, 0)),                  # Wk^T
            pl.BlockSpec((1, H), lambda s: (0, 0)),                  # bk
            pl.BlockSpec((H, O), lambda s: (0, 0)),                  # Wp^T
            pl.BlockSpec((1, O), lambda s: (0, 0)),                  # bp
        ],
        out_specs=out_specs,
    )

    cost = pl.CostEstimate(
        flops=int(2 * B * KL * E * H + 4 * B * QL * KL * H + 2 * B * QL * H * O),
        transcendentals=int(B * QL * KL),
        bytes_accessed=int(B * KL * E * in_dsize
                           + (E * H + H * O) * in_dsize + (QL * H + H + O) * 4
                           + B * QL * O * 4
                           + (B * QL * KL * 4 if return_score else 0)))

    kernel = functools.partial(_noquery_attn_kernel, bt=Bt, kl=KL, ql=QL)

    results = pl.pallas_call(
        kernel,
        out_shape=tuple(out_shapes),
        grid_spec=grid_spec,
        cost_estimate=cost,
        compiler_params=pltpu.CompilerParams(
            dimension_semantics=("parallel",),
            vmem_limit_bytes=int(vmem_limit)),
    )(k_folded, qx, wk_c, bk_f, wp_c, bp_f)

    out = results[0].reshape(B, QL, O)
    if return_score:
        return out, results[1].reshape(B, QL, KL)
    return out


if __name__ == "__main__":
    # NoQueryAttention defaults: embed_dim=32, n_head=1 -> hidden=32, out=32, q_len=1.
    B, KL, E = 8, 8, 32
    H, O, QL = E, E, 1

    key = jax.random.PRNGKey(0)
    ks = jax.random.split(key, 8)

    k_in = jax.random.normal(ks[0], (B, KL, E), dtype=jnp.float32)

    # Deterministic parameter init matching the PyTorch init ranges.
    lin_std = 1.0 / math.sqrt(E)      # nn.Linear default: U(-1/sqrt(in), 1/sqrt(in))
    proj_std = 1.0 / math.sqrt(H)
    q_std = 1.0 / math.sqrt(E)        # reset_q: U(-1/sqrt(embed_dim), ...)

    wk_t = jax.random.uniform(ks[1], (E, H), jnp.float32, -lin_std, lin_std)
    bk = jax.random.uniform(ks[2], (1, H), jnp.float32, -lin_std, lin_std)
    wq_t = jax.random.uniform(ks[3], (E, H), jnp.float32, -lin_std, lin_std)
    bq = jax.random.uniform(ks[4], (1, H), jnp.float32, -lin_std, lin_std)
    wp_t = jax.random.uniform(ks[5], (H, O), jnp.float32, -proj_std, proj_std)
    bp = jax.random.uniform(ks[6], (1, O), jnp.float32, -proj_std, proj_std)
    q_param = jax.random.uniform(ks[7], (QL, E), jnp.float32, -q_std, q_std)

    ref_out, ref_score = _reference(k_in, q_param, wk_t, bk, wq_t, bq, wp_t, bp)

    # 1) f32 Pallas path (strict check against the PyTorch-equivalent reference;
    #    approx reciprocal + Newton step slightly relaxes the tolerance).
    out32, score32 = noquery_attention(
        k_in, q_param, wk_t, bk, wq_t, bq, wp_t, bp,
        return_score=True, compute_dtype=jnp.float32, prefer_xla_below_bytes=0)
    jax.block_until_ready((out32, score32))
    assert jnp.allclose(out32, ref_out, atol=2e-5, rtol=2e-5)
    assert jnp.allclose(score32, ref_score, atol=2e-5, rtol=2e-5)

    # 2) Default bf16 compute path (halved k HBM stream); relaxed tolerance.
    out_bf, score_bf = noquery_attention(
        k_in, q_param, wk_t, bk, wq_t, bq, wp_t, bp,
        return_score=True, prefer_xla_below_bytes=0)
    jax.block_until_ready((out_bf, score_bf))
    assert jnp.allclose(out_bf, ref_out, atol=2e-2, rtol=2e-2)
    assert jnp.allclose(score_bf, ref_score, atol=2e-2, rtol=2e-2)

    # 3) Output-only variant (no score writeback), also through the Pallas path.
    out_only = noquery_attention(k_in, q_param, wk_t, bk, wq_t, bq, wp_t, bp,
                                 prefer_xla_below_bytes=0)
    jax.block_until_ready(out_only)
    assert jnp.allclose(out_only, ref_out, atol=2e-2, rtol=2e-2)

    print("KERNEL_OK")
</pallas_src>

<mosaic_0001>
module attributes {stable_mosaic.version = 11 : i64} {
  func.func @_noquery_attn_kernel(%arg0: i32, %arg1: memref<1x64x32xf32, #tpu.memory_space<vmem>>, %arg2: memref<1x32xf32, #tpu.memory_space<vmem>>, %arg3: memref<32x32xf32, #tpu.memory_space<vmem>>, %arg4: memref<1x32xf32, #tpu.memory_space<vmem>>, %arg5: memref<32x32xf32, #tpu.memory_space<vmem>>, %arg6: memref<1x32xf32, #tpu.memory_space<vmem>>, %arg7: memref<1x8x32xf32, #tpu.memory_space<vmem>>, %arg8: memref<1x8x8xf32, #tpu.memory_space<vmem>>) attributes {dimension_semantics = [#tpu.dimension_semantics<parallel>], iteration_bounds = array<i64: 1>, scalar_prefetch = 0 : i64, scratch_operands = 0 : i64, tpu.core_type = #tpu.core_type<tc>, window_params = [{transform_indices = @transform_0, window_bounds = array<i64: 1, 64, 32>}, {pipeline_mode = #tpu.pipeline_mode<synchronous>, transform_indices = @transform_1, window_bounds = array<i64: 1, 32>}, {pipeline_mode = #tpu.pipeline_mode<synchronous>, transform_indices = @transform_2, window_bounds = array<i64: 32, 32>}, {pipeline_mode = #tpu.pipeline_mode<synchronous>, transform_indices = @transform_3, window_bounds = array<i64: 1, 32>}, {pipeline_mode = #tpu.pipeline_mode<synchronous>, transform_indices = @transform_4, window_bounds = array<i64: 32, 32>}, {pipeline_mode = #tpu.pipeline_mode<synchronous>, transform_indices = @transform_5, window_bounds = array<i64: 1, 32>}, {transform_indices = @transform_6, window_bounds = array<i64: 1, 8, 32>}, {transform_indices = @transform_7, window_bounds = array<i64: 1, 8, 8>}]} {
    %c0 = arith.constant 0 : index
    %c0_0 = arith.constant 0 : index
    %c0_1 = arith.constant 0 : index
    %0 = vector.load %arg1[%c0, %c0_0, %c0_1] : memref<1x64x32xf32, #tpu.memory_space<vmem>>, vector<1x64x32xf32>
    %1 = vector.shape_cast %0 : vector<1x64x32xf32> to vector<64x32xf32>
    %c0_2 = arith.constant 0 : index
    %c0_3 = arith.constant 0 : index
    %2 = vector.load %arg3[%c0_2, %c0_3] : memref<32x32xf32, #tpu.memory_space<vmem>>, vector<32x32xf32>
    %cst = arith.constant dense<0.000000e+00> : vector<64x32xf32>
    %3 = tpu.matmul %1, %2, %cst {dimension_numbers = #tpu.dot_dimension_numbers<[1], [0], [0], [1], [0, 0, 1, 1], [], []>} : vector<64x32xf32>, vector<32x32xf32>, vector<64x32xf32> -> vector<64x32xf32>
    %c0_4 = arith.constant 0 : index
    %c0_5 = arith.constant 0 : index
    %4 = vector.load %arg4[%c0_4, %c0_5] : memref<1x32xf32, #tpu.memory_space<vmem>>, vector<1x32xf32>
    %5 = vector.broadcast %4 : vector<1x32xf32> to vector<64x32xf32>
    %6 = arith.addf %3, %5 : vector<64x32xf32>
    %7 = vector.shape_cast %6 : vector<64x32xf32> to vector<8x8x32xf32>
    %c0_6 = arith.constant 0 : index
    %c0_7 = arith.constant 0 : index
    %8 = vector.load %arg2[%c0_6, %c0_7] : memref<1x32xf32, #tpu.memory_space<vmem>>, vector<1x32xf32>
    %9 = vector.shape_cast %8 : vector<1x32xf32> to vector<1x1x32xf32>
    %10 = vector.broadcast %9 : vector<1x1x32xf32> to vector<8x8x32xf32>
    %11 = arith.mulf %7, %10 : vector<8x8x32xf32>
    %cst_8 = arith.constant dense<0.000000e+00> : vector<8x8xf32>
    %12 = vector.multi_reduction <add>, %11, %cst_8 [2] : vector<8x8x32xf32> to vector<8x8xf32>
    %cst_9 = arith.constant dense<0xFF800000> : vector<8xf32>
    %13 = vector.multi_reduction <maximumf>, %12, %cst_9 [1] : vector<8x8xf32> to vector<8xf32>
    %14 = vector.shape_cast %13 : vector<8xf32> to vector<8x1xf32>
    %15 = vector.broadcast %14 : vector<8x1xf32> to vector<8x8xf32>
    %16 = arith.subf %12, %15 : vector<8x8xf32>
    %17 = math.exp %16 : vector<8x8xf32>
    %cst_10 = arith.constant dense<0.000000e+00> : vector<8xf32>
    %18 = vector.multi_reduction <add>, %17, %cst_10 [1] : vector<8x8xf32> to vector<8xf32>
    %19 = vector.shape_cast %18 : vector<8xf32> to vector<8x1xf32>
    %20 = tpu.reciprocal %19 {approx = true} : vector<8x1xf32> -> vector<8x1xf32>
    %21 = arith.mulf %19, %20 : vector<8x1xf32>
    %cst_11 = arith.constant 2.000000e+00 : f32
    %22 = vector.broadcast %cst_11 : f32 to vector<8x1xf32>
    %23 = arith.subf %22, %21 : vector<8x1xf32>
    %24 = arith.mulf %20, %23 : vector<8x1xf32>
    %25 = vector.broadcast %24 : vector<8x1xf32> to vector<8x8xf32>
    %26 = arith.mulf %17, %25 : vector<8x8xf32>
    %27 = vector.shape_cast %26 : vector<8x8xf32> to vector<8x1x8xf32>
    "tpu.trace_start"() <{level = 10 : i32, message = "bqk,bkh->bqh"}> : () -> ()
    %cst_12 = arith.constant dense<0.000000e+00> : vector<8x1x32xf32>
    %28 = tpu.matmul %27, %7, %cst_12 {dimension_numbers = #tpu.dot_dimension_numbers<[2], [1], [1], [2], [0, 0, 0, 1, 1, 2], [0], [0]>} : vector<8x1x8xf32>, vector<8x8x32xf32>, vector<8x1x32xf32> -> vector<8x1x32xf32>
    "tpu.trace_stop"() : () -> ()
    %29 = vector.shape_cast %28 : vector<8x1x32xf32> to vector<8x32xf32>
    %c0_13 = arith.constant 0 : index
    %c0_14 = arith.constant 0 : index
    %30 = vector.load %arg5[%c0_13, %c0_14] : memref<32x32xf32, #tpu.memory_space<vmem>>, vector<32x32xf32>
    %cst_15 = arith.constant dense<0.000000e+00> : vector<8x32xf32>
    %31 = tpu.matmul %29, %30, %cst_15 {dimension_numbers = #tpu.dot_dimension_numbers<[1], [0], [0], [1], [0, 0, 1, 1], [], []>} : vector<8x32xf32>, vector<32x32xf32>, vector<8x32xf32> -> vector<8x32xf32>
    %c0_16 = arith.constant 0 : index
    %c0_17 = arith.constant 0 : index
    %32 = vector.load %arg6[%c0_16, %c0_17] : memref<1x32xf32, #tpu.memory_space<vmem>>, vector<1x32xf32>
    %33 = vector.broadcast %32 : vector<1x32xf32> to vector<8x32xf32>
    %34 = arith.addf %31, %33 : vector<8x32xf32>
    %c0_18 = arith.constant 0 : index
    %c0_19 = arith.constant 0 : index
    %c0_20 = arith.constant 0 : index
    %35 = vector.load %arg7[%c0_18, %c0_19, %c0_20] : memref<1x8x32xf32, #tpu.memory_space<vmem>>, vector<1x8x32xf32>
    %36 = vector.shape_cast %35 : vector<1x8x32xf32> to vector<8x32xf32>
    %37 = vector.shape_cast %34 : vector<8x32xf32> to vector<1x8x32xf32>
    tpu.vector_store %arg7[%c0_18, %c0_19, %c0_20], %37 {strides = array<i32>} : memref<1x8x32xf32, #tpu.memory_space<vmem>>, vector<1x8x32xf32>,
    %c0_21 = arith.constant 0 : index
    %c0_22 = arith.constant 0 : index
    %c0_23 = arith.constant 0 : index
    %38 = vector.load %arg8[%c0_21, %c0_22, %c0_23] : memref<1x8x8xf32, #tpu.memory_space<vmem>>, vector<1x8x8xf32>
    %39 = vector.shape_cast %38 : vector<1x8x8xf32> to vector<8x8xf32>
    %40 = vector.shape_cast %26 : vector<8x8xf32> to vector<1x8x8xf32>
    tpu.vector_store %arg8[%c0_21, %c0_22, %c0_23], %40 {strides = array<i32>} : memref<1x8x8xf32, #tpu.memory_space<vmem>>, vector<1x8x8xf32>,
    return
  }
  func.func @transform_0(%arg0: i32) -> (i32, i32, i32) {
    %c0_i32 = arith.constant 0 : i32
    %c0_i32_0 = arith.constant 0 : i32
    %c0_i32_1 = arith.constant 0 : i32
    return %arg0, %c0_i32, %c0_i32_0 : i32, i32, i32
  }
  func.func @transform_1(%arg0: i32) -> (i32, i32) {
    %c0_i32 = arith.constant 0 : i32
    %c0_i32_0 = arith.constant 0 : i32
    %c0_i32_1 = arith.constant 0 : i32
    return %c0_i32, %c0_i32_0 : i32, i32
  }
  func.func @transform_2(%arg0: i32) -> (i32, i32) {
    %c0_i32 = arith.constant 0 : i32
    %c0_i32_0 = arith.constant 0 : i32
    %c0_i32_1 = arith.constant 0 : i32
    return %c0_i32, %c0_i32_0 : i32, i32
  }
  func.func @transform_3(%arg0: i32) -> (i32, i32) {
    %c0_i32 = arith.constant 0 : i32
    %c0_i32_0 = arith.constant 0 : i32
    %c0_i32_1 = arith.constant 0 : i32
    return %c0_i32, %c0_i32_0 : i32, i32
  }
  func.func @transform_4(%arg0: i32) -> (i32, i32) {
    %c0_i32 = arith.constant 0 : i32
    %c0_i32_0 = arith.constant 0 : i32
    %c0_i32_1 = arith.constant 0 : i32
    return %c0_i32, %c0_i32_0 : i32, i32
  }
  func.func @transform_5(%arg0: i32) -> (i32, i32) {
    %c0_i32 = arith.constant 0 : i32
    %c0_i32_0 = arith.constant 0 : i32
    %c0_i32_1 = arith.constant 0 : i32
    return %c0_i32, %c0_i32_0 : i32, i32
  }
  func.func @transform_6(%arg0: i32) -> (i32, i32, i32) {
    %c0_i32 = arith.constant 0 : i32
    %c0_i32_0 = arith.constant 0 : i32
    %c0_i32_1 = arith.constant 0 : i32
    return %arg0, %c0_i32, %c0_i32_0 : i32, i32, i32
  }
  func.func @transform_7(%arg0: i32) -> (i32, i32, i32) {
    %c0_i32 = arith.constant 0 : i32
    %c0_i32_0 = arith.constant 0 : i32
    %c0_i32_1 = arith.constant 0 : i32
    return %arg0, %c0_i32, %c0_i32_0 : i32, i32, i32
  }
}

</mosaic_0001>

<llo_original>
// kernel: tpu_custom_call.1
$region0: #{tpu_custom_call.1}
  #allocation0 [shape = 'u32[]', space=smem, size = 0x4, offset = 0x4, fixed_abs, tag = 'smem constant byte address 0x4 - core index']
  #allocation1 [shape = 'u32[144,128]{1,0:T(1,128)}', space=vmem, size = 0x12000, scoped, tag = 'internal scratch']
  %s0 = inlined_call_operand.vmem [shape: f32[1,64,32], index: 0, kind: input, shape index: {}]
  %s1 = inlined_call_operand.vmem [shape: f32[1,32], index: 1, kind: input, shape index: {}]
  %s2 = inlined_call_operand.vmem [shape: f32[32,32], index: 2, kind: input, shape index: {}]
  %s3 = inlined_call_operand.vmem [shape: f32[1,32], index: 3, kind: input, shape index: {}]
  %s4 = inlined_call_operand.vmem [shape: f32[32,32], index: 4, kind: input, shape index: {}]
  %s5 = inlined_call_operand.vmem [shape: f32[1,32], index: 5, kind: input, shape index: {}]
  %s6 = inlined_call_operand.hbm [shape: f32[1,8,32], index: 6, kind: output, shape index: {0}]
  %s7 = inlined_call_operand.hbm [shape: f32[1,8,8], index: 7, kind: output, shape index: {1}]
  %8 = xla_tuple %s6, %s7
  %s9 = sld [smem:[#allocation0]]
  $region42: #{tpu_custom_call.1} parent=0
    _
  %s11 = ssub.s32 1, %s9
  %s12 = scalar_select 0, %s11, %s9
  $region1: #{tpu_custom_call.1} parent=0
    #allocation2 [shape = 'u8[4096]{0}', space=vmem, size = 0x1000, scoped, tag = 'output window, operand 0, single buffered']
    #allocation3 [shape = 's32[1]{0}', space=sflag, size = 0x4, scoped, tag = 'scoped memory for tpu_custom_call.1']
    #allocation4 [shape = 'u8[4096]{0}', space=vmem, size = 0x1000, scoped, tag = 'output window, operand 1, single buffered']
    #allocation5 [shape = 's32[1]{0}', space=sflag, size = 0x4, scoped, tag = 'scoped memory for tpu_custom_call.1']
    %13 = vsyncpa [#allocation3], 0
    %14 = vsyncpa [#allocation5], 0
    // Predicated region
    $region2: #{tpu_custom_call.1} parent=1 // pred_check
      _
    $region3: #{tpu_custom_call.1} parent=1 // pred_check_branch
      %16 = sbr.rel (0) target = $region5
    $region4: #{tpu_custom_call.1} parent=1 // pred_region
      _
    $region5: #{tpu_custom_call.1} parent=1 // pred_fallthru
      _
    // Predicated region
    $region6: #{tpu_custom_call.1} parent=1 // pred_check
      _
    $region7: #{tpu_custom_call.1} parent=1 // pred_check_branch
      %18 = sbr.rel (0) target = $region9
    $region8: #{tpu_custom_call.1} parent=1 // pred_region
      _
    $region9: #{tpu_custom_call.1} parent=1 // pred_fallthru
      _
    // Predicated region
    $region10: #{tpu_custom_call.1} parent=1 // pred_check
      _
    $region11: #{tpu_custom_call.1} parent=1 // pred_check_branch
      %20 = sbr.rel (0) target = $region13
    $region12: #{tpu_custom_call.1} parent=1 // pred_region
      _
    $region13: #{tpu_custom_call.1} parent=1 // pred_fallthru
      _
    // Predicated region
    $region14: #{tpu_custom_call.1} parent=1 // pred_check
      _
    $region15: #{tpu_custom_call.1} parent=1 // pred_check_branch
      %22 = sbr.rel (0) target = $region17
    $region16: #{tpu_custom_call.1} parent=1 // pred_region
      _
    $region17: #{tpu_custom_call.1} parent=1 // pred_fallthru
      _
    // Predicated region
    $region18: #{tpu_custom_call.1} parent=1 // pred_check
      _
    $region19: #{tpu_custom_call.1} parent=1 // pred_check_branch
      %24 = sbr.rel (0) target = $region21
    $region20: #{tpu_custom_call.1} parent=1 // pred_region
      _
    $region21: #{tpu_custom_call.1} parent=1 // pred_fallthru
      _
    // Predicated region
    $region22: #{tpu_custom_call.1} parent=1 // pred_check
      _
    $region23: #{tpu_custom_call.1} parent=1 // pred_check_branch
      %26 = sbr.rel (0) target = $region25
    $region24: #{tpu_custom_call.1} parent=1 // pred_region
      _
    $region25: #{tpu_custom_call.1} parent=1 // pred_fallthru
      _
    %v27 = vld [vmem:[%s0] sm:$0xff]
    %v28 = vld [vmem:[%s0 + $0x8] sm:$0xff]
    %v29 = vld [vmem:[%s0 + $0x10] sm:$0xff]
    %v30 = vld [vmem:[%s0 + $0x18] sm:$0xff]
    %v31 = vld [vmem:[%s0 + $0x20] sm:$0xff]
    %v32 = vld [vmem:[%s0 + $0x28] sm:$0xff]
    %v33 = vld [vmem:[%s0 + $0x30] sm:$0xff]
    %v34 = vld [vmem:[%s0 + $0x38] sm:$0xff]
    %v35 = vld [vmem:[%s2] sm:$0xff]
    %v36 = vld [vmem:[%s2 + $0x8] sm:$0xff]
    %v37 = vld [vmem:[%s2 + $0x10] sm:$0xff]
    %v38 = vld [vmem:[%s2 + $0x18] sm:$0xff]
    %v39 = vld [vmem:[%s3] sm:$0x1]
    %v41 = vlaneseq
    %v42 = vshrl.u32 %v41, 7
    %v43 = vsub.s32 0, %v42
    %v44 = vrot.slane %v39, %v43
    %vm46 = vcmask 261120
    %v48 = vsel %vm46, %v27, 0
    %v51 = vsel %vm46, %v28, 0
    %v54 = vsel %vm46, %v29, 0
    %v57 = vsel %vm46, %v30, 0
    %v60 = vsel %vm46, %v31, 0
    %v63 = vsel %vm46, %v32, 0
    %v66 = vsel %vm46, %v33, 0
    %v69 = vsel %vm46, %v34, 0
    %71 = vmatprep.subr.mxu0 0.0
    %72 = vmatpush1.msra.mxu0 %v35
    %73 = vmatprep.subr.mxu0 0.0
    %74 = vmatpush1.msra.mxu0 %v36
    %75 = vmatprep.subr.mxu0 0.0
    %76 = vmatpush1.msra.mxu0 %v37
    %77 = vmatprep.subr.mxu0 0.0
    %78 = vmatpush1.msra.mxu0 %v38
    %79 = vmatprep.subr.mxu0 0.0
    %80 = vmatpush1.msra.mxu0 0.0
    %81 = vmatprep.subr.mxu0 0.0
    %82 = vmatpush1.msra.mxu0 0.0
    %83 = vmatprep.subr.mxu0 0.0
    %84 = vmatpush1.msra.mxu0 0.0
    %85 = vmatprep.subr.mxu0 0.0
    %86 = vmatpush1.msra.mxu0 0.0
    %87 = vmatprep.subr.mxu0 0.0
    %88 = vmatpush1.msra.mxu0 0.0
    %89 = vmatprep.subr.mxu0 0.0
    %90 = vmatpush1.msra.mxu0 0.0
    %91 = vmatprep.subr.mxu0 0.0
    %92 = vmatpush1.msra.mxu0 0.0
    %93 = vmatprep.subr.mxu0 0.0
    %94 = vmatpush1.msra.mxu0 0.0
    %95 = vmatprep.subr.mxu0 0.0
    %96 = vmatpush1.msra.mxu0 0.0
    %97 = vmatprep.subr.mxu0 0.0
    %98 = vmatpush1.msra.mxu0 0.0
    %99 = vmatprep.subr.mxu0 0.0
    %100 = vmatpush1.msra.mxu0 0.0
    %101 = vmatprep.subr.mxu0 0.0
    %102 = vmatpush1.msra.mxu0 0.0
    %103 = vmatprep.subr.mxu0 0.0
    %104 = vmatpush1.msra.mxu0 0.0
    %105 = vmatprep.subr.mxu0 0.0
    %106 = vmatpush1.msra.mxu0 0.0
    %107 = vmatprep.subr.mxu0 0.0
    %108 = vmatpush1.msra.mxu0 0.0
    %109 = vmatprep.subr.mxu0 0.0
    %110 = vmatpush1.msra.mxu0 0.0
    %111 = vmatprep.subr.mxu0 0.0
    %112 = vmatpush1.msra.mxu0 0.0
    %113 = vmatprep.subr.mxu0 0.0
    %114 = vmatpush1.msra.mxu0 0.0
    %115 = vmatprep.subr.mxu0 0.0
    %116 = vmatpush1.msra.mxu0 0.0
    %117 = vmatprep.subr.mxu0 0.0
    %118 = vmatpush1.msra.mxu0 0.0
    %119 = vmatprep.subr.mxu0 0.0
    %120 = vmatpush1.msra.mxu0 0.0
    %121 = vmatprep.subr.mxu0 0.0
    %122 = vmatpush1.msra.mxu0 0.0
    %123 = vmatprep.subr.mxu0 0.0
    %124 = vmatpush1.msra.mxu0 0.0
    %125 = vmatprep.subr.mxu0 0.0
    %126 = vmatpush1.msra.mxu0 0.0
    %127 = vmatprep.subr.mxu0 0.0
    %128 = vmatpush1.msra.mxu0 0.0
    %129 = vmatprep.subr.mxu0 0.0
    %130 = vmatpush1.msra.mxu0 0.0
    %131 = vmatprep.subr.mxu0 0.0
    %132 = vmatpush1.msra.mxu0 0.0
    %133 = vmatprep.subr.mxu0 0.0
    %134 = vmatpush1.msra.mxu0 0.0
    %135 = vmatprep.mubr.f32.mxu0 0.0
    %136 = vmatmul.mubr.f32.gmra.mrb[0].mxu0 %v48
    %v137 = vpop.f32.mrb[0].mxu0
    %v138 = vadd.f32 %v44, %v137
    %v139 = vpop.f32.mrb[0].mxu0
    %140 = vmatprep.mubr.f32.mxu0 0.0
    %141 = vmatmul.mubr.f32.gmra.mrb[0].mxu0 %v51
    %v142 = vpop.f32.mrb[0].mxu0
    %v143 = vadd.f32 %v44, %v142
    %v144 = vpop.f32.mrb[0].mxu0
    %145 = vmatprep.mubr.f32.mxu0 0.0
    %146 = vmatmul.mubr.f32.gmra.mrb[0].mxu0 %v54
    %v147 = vpop.f32.mrb[0].mxu0
    %v148 = vadd.f32 %v44, %v147
    %v149 = vpop.f32.mrb[0].mxu0
    %150 = vmatprep.mubr.f32.mxu0 0.0
    %151 = vmatmul.mubr.f32.gmra.mrb[0].mxu0 %v57
    %v152 = vpop.f32.mrb[0].mxu0
    %v153 = vadd.f32 %v44, %v152
    %v154 = vpop.f32.mrb[0].mxu0
    %155 = vmatprep.mubr.f32.mxu0 0.0
    %156 = vmatmul.mubr.f32.gmra.mrb[0].mxu0 %v60
    %v157 = vpop.f32.mrb[0].mxu0
    %v158 = vadd.f32 %v44, %v157
    %v159 = vpop.f32.mrb[0].mxu0
    %160 = vmatprep.mubr.f32.mxu0 0.0
    %161 = vmatmul.mubr.f32.gmra.mrb[0].mxu0 %v63
    %v162 = vpop.f32.mrb[0].mxu0
    %v163 = vadd.f32 %v44, %v162
    %v164 = vpop.f32.mrb[0].mxu0
    %165 = vmatprep.mubr.f32.mxu0 0.0
    %166 = vmatmul.mubr.f32.gmra.mrb[0].mxu0 %v66
    %v167 = vpop.f32.mrb[0].mxu0
    %v168 = vadd.f32 %v44, %v167
    %v169 = vpop.f32.mrb[0].mxu0
    %170 = vmatprep.mubr.f32.mxu0 0.0
    %171 = vmatmul.mubr.f32.gmra.mrb[0].mxu0 %v69
    %v172 = vpop.f32.mrb[0].mxu0
    %v173 = vadd.f32 %v44, %v172
    %v174 = vpop.f32.mrb[0].mxu0
    %175 = vdwg.mxu0
    %v176 = vld [vmem:[%s1] sm:$0x1]
    %v178 = vlaneseq
    %v179 = vshrl.u32 %v178, 7
    %v180 = vsub.s32 0, %v179
    %v181 = vrot.slane %v176, %v180
    %v183 = vmul.f32 %v138, %v181
    %v184 = vmul.f32 %v143, %v181
    %v185 = vmul.f32 %v148, %v181
    %v186 = vmul.f32 %v153, %v181
    %v187 = vmul.f32 %v158, %v181
    %v188 = vmul.f32 %v163, %v181
    %v189 = vmul.f32 %v168, %v181
    %v190 = vmul.f32 %v173, %v181
    %v191 = vsel %vm46, %v183, 0.0
    %192 = vadd.xlane.f32.xlu0 %v191
    %v193 = vpop.xlane.xlu0 %192
    %v194 = vsel %vm46, %v184, 0.0
    %195 = vadd.xlane.f32.xlu0 %v194
    %v196 = vpop.xlane.xlu0 %195
    %v197 = vsel %vm46, %v185, 0.0
    %198 = vadd.xlane.f32.xlu0 %v197
    %v199 = vpop.xlane.xlu0 %198
    %v200 = vsel %vm46, %v186, 0.0
    %201 = vadd.xlane.f32.xlu0 %v200
    %v202 = vpop.xlane.xlu0 %201
    %v203 = vsel %vm46, %v187, 0.0
    %204 = vadd.xlane.f32.xlu0 %v203
    %v205 = vpop.xlane.xlu0 %204
    %v206 = vsel %vm46, %v188, 0.0
    %207 = vadd.xlane.f32.xlu0 %v206
    %v208 = vpop.xlane.xlu0 %207
    %v209 = vsel %vm46, %v189, 0.0
    %210 = vadd.xlane.f32.xlu0 %v209
    %v211 = vpop.xlane.xlu0 %210
    %v212 = vsel %vm46, %v190, 0.0
    %213 = vadd.xlane.f32.xlu0 %v212
    %v214 = vpop.xlane.xlu0 %213
    %v223 = vlaneseq
    %v224 = vand.u32 %v223, 127
    %v225 = vlaneseq
    %v226 = vshrl.u32 %v225, 7
    %v227 = vsub.s32 %v224, %v226
    %v228 = vrot.slane %v193, %v227
    %v229 = vlaneseq
    %v230 = vshrl.u32 %v229, 7
    %v231 = vsub.s32 %v224, %v230
    %v232 = vrot.slane %v196, %v231
    %v233 = vlaneseq
    %v234 = vshrl.u32 %v233, 7
    %v235 = vsub.s32 %v224, %v234
    %v236 = vrot.slane %v199, %v235
    %v237 = vlaneseq
    %v238 = vshrl.u32 %v237, 7
    %v239 = vsub.s32 %v224, %v238
    %v240 = vrot.slane %v202, %v239
    %v241 = vlaneseq
    %v242 = vshrl.u32 %v241, 7
    %v243 = vsub.s32 %v224, %v242
    %v244 = vrot.slane %v205, %v243
    %v245 = vlaneseq
    %v246 = vshrl.u32 %v245, 7
    %v247 = vsub.s32 %v224, %v246
    %v248 = vrot.slane %v208, %v247
    %v249 = vlaneseq
    %v250 = vshrl.u32 %v249, 7
    %v251 = vsub.s32 %v224, %v250
    %v252 = vrot.slane %v211, %v251
    %v253 = vlaneseq
    %v254 = vshrl.u32 %v253, 7
    %v255 = vsub.s32 %v224, %v254
    %v256 = vrot.slane %v214, %v255
    %vm257 = vcmask 1041409
    %v258 = vsel %vm257, %v232, %v228
    %vm259 = vcmask 1042434
    %v260 = vsel %vm259, %v236, %v258
    %vm261 = vcmask 1043459
    %v262 = vsel %vm261, %v240, %v260
    %vm263 = vcmask 1044484
    %v264 = vsel %vm263, %v244, %v262
    %vm265 = vcmask 1045509
    %v266 = vsel %vm265, %v248, %v264
    %vm267 = vcmask 1046534
    %v268 = vsel %vm267, %v252, %v266
    %vm269 = vcmask 1047559
    %v270 = vsel %vm269, %v256, %v268
    %vm272 = vcmask 64512
    %v273 = vsel %vm272, %v270, -inf
    %274 = vmax.xlane.f32.xlu0 %v273
    %v275 = vpop.xlane.xlu0 %274
    %v277 = vlaneseq
    %v278 = vshrl.u32 %v277, 7
    %v279 = vsub.s32 0, %v278
    %v280 = vrot.slane %v275, %v279
    %v281 = vlaneseq
    %v282 = vshrl.u32 %v281, 7
    %v283 = vsub.s32 1, %v282
    %v284 = vrot.slane %v275, %v283
    %v285 = vlaneseq
    %v286 = vshrl.u32 %v285, 7
    %v287 = vsub.s32 2, %v286
    %v288 = vrot.slane %v275, %v287
    %v289 = vlaneseq
    %v290 = vshrl.u32 %v289, 7
    %v291 = vsub.s32 3, %v290
    %v292 = vrot.slane %v275, %v291
    %v293 = vlaneseq
    %v294 = vshrl.u32 %v293, 7
    %v295 = vsub.s32 4, %v294
    %v296 = vrot.slane %v275, %v295
    %v297 = vlaneseq
    %v298 = vshrl.u32 %v297, 7
    %v299 = vsub.s32 5, %v298
    %v300 = vrot.slane %v275, %v299
    %v301 = vlaneseq
    %v302 = vshrl.u32 %v301, 7
    %v303 = vsub.s32 6, %v302
    %v304 = vrot.slane %v275, %v303
    %v305 = vlaneseq
    %v306 = vshrl.u32 %v305, 7
    %v307 = vsub.s32 7, %v306
    %v308 = vrot.slane %v275, %v307
    %v317 = vsub.f32 %v193, %v280
    %v318 = vsub.f32 %v196, %v284
    %v319 = vsub.f32 %v199, %v288
    %v320 = vsub.f32 %v202, %v292
    %v321 = vsub.f32 %v205, %v296
    %v322 = vsub.f32 %v208, %v300
    %v323 = vsub.f32 %v211, %v304
    %v324 = vsub.f32 %v214, %v308
    %v325 = vmul.f32 %v317, 1.442695
    %v326 = vpow.pop %v325
    %v327 = vmul.f32 %v318, 1.442695
    %v328 = vpow.pop %v327
    %v329 = vmul.f32 %v319, 1.442695
    %v330 = vpow.pop %v329
    %v331 = vmul.f32 %v320, 1.442695
    %v332 = vpow.pop %v331
    %v333 = vmul.f32 %v321, 1.442695
    %v334 = vpow.pop %v333
    %v335 = vmul.f32 %v322, 1.442695
    %v336 = vpow.pop %v335
    %v337 = vmul.f32 %v323, 1.442695
    %v338 = vpow.pop %v337
    %v339 = vmul.f32 %v324, 1.442695
    %v340 = vpow.pop %v339
    %349 = vset.pattern.permute.xlu0 0
    %350 = vperm.xlu0 %349, %v326
    %v351 = vpop.permute.xlu0 %350
    %352 = vset.pattern.permute.xlu0 0
    %353 = vperm.xlu0 %352, %v328
    %v354 = vpop.permute.xlu0 %353
    %355 = vset.pattern.permute.xlu0 0
    %356 = vperm.xlu0 %355, %v330
    %v357 = vpop.permute.xlu0 %356
    %358 = vset.pattern.permute.xlu0 0
    %359 = vperm.xlu0 %358, %v332
    %v360 = vpop.permute.xlu0 %359
    %361 = vset.pattern.permute.xlu0 0
    %362 = vperm.xlu0 %361, %v334
    %v363 = vpop.permute.xlu0 %362
    %364 = vset.pattern.permute.xlu0 0
    %365 = vperm.xlu0 %364, %v336
    %v366 = vpop.permute.xlu0 %365
    %367 = vset.pattern.permute.xlu0 0
    %368 = vperm.xlu0 %367, %v338
    %v369 = vpop.permute.xlu0 %368
    %370 = vset.pattern.permute.xlu0 0
    %371 = vperm.xlu0 %370, %v340
    %v372 = vpop.permute.xlu0 %371
    %v373 = vlaneseq
    %v374 = vshrl.u32 %v373, 7
    %v375 = vsub.s32 %v224, %v374
    %v376 = vrot.slane %v351, %v375
    %v377 = vlaneseq
    %v378 = vshrl.u32 %v377, 7
    %v379 = vsub.s32 %v224, %v378
    %v380 = vrot.slane %v354, %v379
    %v381 = vlaneseq
    %v382 = vshrl.u32 %v381, 7
    %v383 = vsub.s32 %v224, %v382
    %v384 = vrot.slane %v357, %v383
    %v385 = vlaneseq
    %v386 = vshrl.u32 %v385, 7
    %v387 = vsub.s32 %v224, %v386
    %v388 = vrot.slane %v360, %v387
    %v389 = vlaneseq
    %v390 = vshrl.u32 %v389, 7
    %v391 = vsub.s32 %v224, %v390
    %v392 = vrot.slane %v363, %v391
    %v393 = vlaneseq
    %v394 = vshrl.u32 %v393, 7
    %v395 = vsub.s32 %v224, %v394
    %v396 = vrot.slane %v366, %v395
    %v397 = vlaneseq
    %v398 = vshrl.u32 %v397, 7
    %v399 = vsub.s32 %v224, %v398
    %v400 = vrot.slane %v369, %v399
    %v401 = vlaneseq
    %v402 = vshrl.u32 %v401, 7
    %v403 = vsub.s32 %v224, %v402
    %v404 = vrot.slane %v372, %v403
    %v405 = vsel %vm257, %v380, %v376
    %v406 = vsel %vm259, %v384, %v405
    %v407 = vsel %vm261, %v388, %v406
    %v408 = vsel %vm263, %v392, %v407
    %v409 = vsel %vm265, %v396, %v408
    %v410 = vsel %vm267, %v400, %v409
    %v411 = vsel %vm269, %v404, %v410
    %v413 = vsel %vm272, %v411, 0.0
    %414 = vadd.xlane.f32.xlu0 %v413
    %v415 = vpop.xlane.xlu0 %414
    %v416 = vrcp.pop %v415
    %v417 = vmul.f32 %v415, %v416
    %v418 = vsub.f32 2.0, %v417
    %v419 = vmul.f32 %v416, %v418
    %v421 = vlaneseq
    %v422 = vshrl.u32 %v421, 7
    %v423 = vsub.s32 0, %v422
    %v424 = vrot.slane %v419, %v423
    %v425 = vlaneseq
    %v426 = vshrl.u32 %v425, 7
    %v427 = vsub.s32 1, %v426
    %v428 = vrot.slane %v419, %v427
    %v429 = vlaneseq
    %v430 = vshrl.u32 %v429, 7
    %v431 = vsub.s32 2, %v430
    %v432 = vrot.slane %v419, %v431
    %v433 = vlaneseq
    %v434 = vshrl.u32 %v433, 7
    %v435 = vsub.s32 3, %v434
    %v436 = vrot.slane %v419, %v435
    %v437 = vlaneseq
    %v438 = vshrl.u32 %v437, 7
    %v439 = vsub.s32 4, %v438
    %v440 = vrot.slane %v419, %v439
    %v441 = vlaneseq
    %v442 = vshrl.u32 %v441, 7
    %v443 = vsub.s32 5, %v442
    %v444 = vrot.slane %v419, %v443
    %v445 = vlaneseq
    %v446 = vshrl.u32 %v445, 7
    %v447 = vsub.s32 6, %v446
    %v448 = vrot.slane %v419, %v447
    %v449 = vlaneseq
    %v450 = vshrl.u32 %v449, 7
    %v451 = vsub.s32 7, %v450
    %v452 = vrot.slane %v419, %v451
    %v461 = vmul.f32 %v326, %v424
    %v462 = vmul.f32 %v328, %v428
    %v463 = vmul.f32 %v330, %v432
    %v464 = vmul.f32 %v332, %v436
    %v465 = vmul.f32 %v334, %v440
    %v466 = vmul.f32 %v336, %v444
    %v467 = vmul.f32 %v338, %v448
    %v468 = vmul.f32 %v340, %v452
    %470 = vset.pattern.permute.xlu0 0
    %471 = vperm.xlu0 %470, %v461
    %v472 = vpop.permute.xlu0 %471
    %v473 = vlaneseq
    %v474 = vshrl.u32 %v473, 7
    %v475 = vsub.s32 %v224, %v474
    %v476 = vrot.slane %v472, %v475
    %v477 = vsel %vm272, %v476, 0
    %479 = vmatprep.subr.mxu0 0.0
    %480 = vmatpush1.msra.mxu0 %v138
    %481 = vmatprep.subr.mxu0 0.0
    %482 = vmatpush1.msra.mxu0 0.0
    %483 = vmatprep.subr.mxu0 0.0
    %484 = vmatpush1.msra.mxu0 0.0
    %485 = vmatprep.subr.mxu0 0.0
    %486 = vmatpush1.msra.mxu0 0.0
    %487 = vmatprep.subr.mxu0 0.0
    %488 = vmatpush1.msra.mxu0 0.0
    %489 = vmatprep.subr.mxu0 0.0
    %490 = vmatpush1.msra.mxu0 0.0
    %491 = vmatprep.subr.mxu0 0.0
    %492 = vmatpush1.msra.mxu0 0.0
    %493 = vmatprep.subr.mxu0 0.0
    %494 = vmatpush1.msra.mxu0 0.0
    %495 = vmatprep.subr.mxu0 0.0
    %496 = vmatpush1.msra.mxu0 0.0
    %497 = vmatprep.subr.mxu0 0.0
    %498 = vmatpush1.msra.mxu0 0.0
    %499 = vmatprep.subr.mxu0 0.0
    %500 = vmatpush1.msra.mxu0 0.0
    %501 = vmatprep.subr.mxu0 0.0
    %502 = vmatpush1.msra.mxu0 0.0
    %503 = vmatprep.subr.mxu0 0.0
    %504 = vmatpush1.msra.mxu0 0.0
    %505 = vmatprep.subr.mxu0 0.0
    %506 = vmatpush1.msra.mxu0 0.0
    %507 = vmatprep.subr.mxu0 0.0
    %508 = vmatpush1.msra.mxu0 0.0
    %509 = vmatprep.subr.mxu0 0.0
    %510 = vmatpush1.msra.mxu0 0.0
    %511 = vmatprep.subr.mxu0 0.0
    %512 = vmatpush1.msra.mxu0 0.0
    %513 = vmatprep.subr.mxu0 0.0
    %514 = vmatpush1.msra.mxu0 0.0
    %515 = vmatprep.subr.mxu0 0.0
    %516 = vmatpush1.msra.mxu0 0.0
    %517 = vmatprep.subr.mxu0 0.0
    %518 = vmatpush1.msra.mxu0 0.0
    %519 = vmatprep.subr.mxu0 0.0
    %520 = vmatpush1.msra.mxu0 0.0
    %521 = vmatprep.subr.mxu0 0.0
    %522 = vmatpush1.msra.mxu0 0.0
    %523 = vmatprep.subr.mxu0 0.0
    %524 = vmatpush1.msra.mxu0 0.0
    %525 = vmatprep.subr.mxu0 0.0
    %526 = vmatpush1.msra.mxu0 0.0
    %527 = vmatprep.subr.mxu0 0.0
    %528 = vmatpush1.msra.mxu0 0.0
    %529 = vmatprep.subr.mxu0 0.0
    %530 = vmatpush1.msra.mxu0 0.0
    %531 = vmatprep.subr.mxu0 0.0
    %532 = vmatpush1.msra.mxu0 0.0
    %533 = vmatprep.subr.mxu0 0.0
    %534 = vmatpush1.msra.mxu0 0.0
    %535 = vmatprep.subr.mxu0 0.0
    %536 = vmatpush1.msra.mxu0 0.0
    %537 = vmatprep.subr.mxu0 0.0
    %538 = vmatpush1.msra.mxu0 0.0
    %539 = vmatprep.subr.mxu0 0.0
    %540 = vmatpush1.msra.mxu0 0.0
    %541 = vmatprep.subr.mxu0 0.0
    %542 = vmatpush1.msra.mxu0 0.0
    %543 = vmatprep.mubr.f32.mxu0 0.0
    %544 = vmatmul.mubr.f32.gmra.mrb[0].mxu0 %v477
    %v545 = vpop.f32.mrb[0].mxu0
    %v546 = vadd.f32 0.0, %v545
    %v547 = vpop.f32.mrb[0].mxu0
    %548 = vdwg.mxu0
    %550 = vset.pattern.permute.xlu0 0
    %551 = vperm.xlu0 %550, %v462
    %v552 = vpop.permute.xlu0 %551
    %v553 = vlaneseq
    %v554 = vshrl.u32 %v553, 7
    %v555 = vsub.s32 %v224, %v554
    %v556 = vrot.slane %v552, %v555
    %v557 = vsel %vm272, %v556, 0
    %559 = vmatprep.subr.mxu0 0.0
    %560 = vmatpush1.msra.mxu0 %v143
    %561 = vmatprep.subr.mxu0 0.0
    %562 = vmatpush1.msra.mxu0 0.0
    %563 = vmatprep.subr.mxu0 0.0
    %564 = vmatpush1.msra.mxu0 0.0
    %565 = vmatprep.subr.mxu0 0.0
    %566 = vmatpush1.msra.mxu0 0.0
    %567 = vmatprep.subr.mxu0 0.0
    %568 = vmatpush1.msra.mxu0 0.0
    %569 = vmatprep.subr.mxu0 0.0
    %570 = vmatpush1.msra.mxu0 0.0
    %571 = vmatprep.subr.mxu0 0.0
    %572 = vmatpush1.msra.mxu0 0.0
    %573 = vmatprep.subr.mxu0 0.0
    %574 = vmatpush1.msra.mxu0 0.0
    %575 = vmatprep.subr.mxu0 0.0
    %576 = vmatpush1.msra.mxu0 0.0
    %577 = vmatprep.subr.mxu0 0.0
    %578 = vmatpush1.msra.mxu0 0.0
    %579 = vmatprep.subr.mxu0 0.0
    %580 = vmatpush1.msra.mxu0 0.0
    %581 = vmatprep.subr.mxu0 0.0
    %582 = vmatpush1.msra.mxu0 0.0
    %583 = vmatprep.subr.mxu0 0.0
    %584 = vmatpush1.msra.mxu0 0.0
    %585 = vmatprep.subr.mxu0 0.0
    %586 = vmatpush1.msra.mxu0 0.0
    %587 = vmatprep.subr.mxu0 0.0
    %588 = vmatpush1.msra.mxu0 0.0
    %589 = vmatprep.subr.mxu0 0.0
    %590 = vmatpush1.msra.mxu0 0.0
    %591 = vmatprep.subr.mxu0 0.0
    %592 = vmatpush1.msra.mxu0 0.0
    %593 = vmatprep.subr.mxu0 0.0
    %594 = vmatpush1.msra.mxu0 0.0
    %595 = vmatprep.subr.mxu0 0.0
    %596 = vmatpush1.msra.mxu0 0.0
    %597 = vmatprep.subr.mxu0 0.0
    %598 = vmatpush1.msra.mxu0 0.0
    %599 = vmatprep.subr.mxu0 0.0
    %600 = vmatpush1.msra.mxu0 0.0
    %601 = vmatprep.subr.mxu0 0.0
    %602 = vmatpush1.msra.mxu0 0.0
    %603 = vmatprep.subr.mxu0 0.0
    %604 = vmatpush1.msra.mxu0 0.0
    %605 = vmatprep.subr.mxu0 0.0
    %606 = vmatpush1.msra.mxu0 0.0
    %607 = vmatprep.subr.mxu0 0.0
    %608 = vmatpush1.msra.mxu0 0.0
    %609 = vmatprep.subr.mxu0 0.0
    %610 = vmatpush1.msra.mxu0 0.0
    %611 = vmatprep.subr.mxu0 0.0
    %612 = vmatpush1.msra.mxu0 0.0
    %613 = vmatprep.subr.mxu0 0.0
    %614 = vmatpush1.msra.mxu0 0.0
    %615 = vmatprep.subr.mxu0 0.0
    %616 = vmatpush1.msra.mxu0 0.0
    %617 = vmatprep.subr.mxu0 0.0
    %618 = vmatpush1.msra.mxu0 0.0
    %619 = vmatprep.subr.mxu0 0.0
    %620 = vmatpush1.msra.mxu0 0.0
    %621 = vmatprep.subr.mxu0 0.0
    %622 = vmatpush1.msra.mxu0 0.0
    %623 = vmatprep.mubr.f32.mxu0 0.0
    %624 = vmatmul.mubr.f32.gmra.mrb[0].mxu0 %v557
    %v625 = vpop.f32.mrb[0].mxu0
    %v626 = vadd.f32 0.0, %v625
    %v627 = vpop.f32.mrb[0].mxu0
    %628 = vdwg.mxu0
    %630 = vset.pattern.permute.xlu0 0
    %631 = vperm.xlu0 %630, %v463
    %v632 = vpop.permute.xlu0 %631
    %v633 = vlaneseq
    %v634 = vshrl.u32 %v633, 7
    %v635 = vsub.s32 %v224, %v634
    %v636 = vrot.slane %v632, %v635
    %v637 = vsel %vm272, %v636, 0
    %639 = vmatprep.subr.mxu0 0.0
    %640 = vmatpush1.msra.mxu0 %v148
    %641 = vmatprep.subr.mxu0 0.0
    %642 = vmatpush1.msra.mxu0 0.0
    %643 = vmatprep.subr.mxu0 0.0
    %644 = vmatpush1.msra.mxu0 0.0
    %645 = vmatprep.subr.mxu0 0.0
    %646 = vmatpush1.msra.mxu0 0.0
    %647 = vmatprep.subr.mxu0 0.0
    %648 = vmatpush1.msra.mxu0 0.0
    %649 = vmatprep.subr.mxu0 0.0
    %650 = vmatpush1.msra.mxu0 0.0
    %651 = vmatprep.subr.mxu0 0.0
    %652 = vmatpush1.msra.mxu0 0.0
    %653 = vmatprep.subr.mxu0 0.0
    %654 = vmatpush1.msra.mxu0 0.0
    %655 = vmatprep.subr.mxu0 0.0
    %656 = vmatpush1.msra.mxu0 0.0
    %657 = vmatprep.subr.mxu0 0.0
    %658 = vmatpush1.msra.mxu0 0.0
    %659 = vmatprep.subr.mxu0 0.0
    %660 = vmatpush1.msra.mxu0 0.0
    %661 = vmatprep.subr.mxu0 0.0
    %662 = vmatpush1.msra.mxu0 0.0
    %663 = vmatprep.subr.mxu0 0.0
    %664 = vmatpush1.msra.mxu0 0.0
    %665 = vmatprep.subr.mxu0 0.0
    %666 = vmatpush1.msra.mxu0 0.0
    %667 = vmatprep.subr.mxu0 0.0
    %668 = vmatpush1.msra.mxu0 0.0
    %669 = vmatprep.subr.mxu0 0.0
    %670 = vmatpush1.msra.mxu0 0.0
    %671 = vmatprep.subr.mxu0 0.0
    %672 = vmatpush1.msra.mxu0 0.0
    %673 = vmatprep.subr.mxu0 0.0
    %674 = vmatpush1.msra.mxu0 0.0
    %675 = vmatprep.subr.mxu0 0.0
    %676 = vmatpush1.msra.mxu0 0.0
    %677 = vmatprep.subr.mxu0 0.0
    %678 = vmatpush1.msra.mxu0 0.0
    %679 = vmatprep.subr.mxu0 0.0
    %680 = vmatpush1.msra.mxu0 0.0
    %681 = vmatprep.subr.mxu0 0.0
    %682 = vmatpush1.msra.mxu0 0.0
    %683 = vmatprep.subr.mxu0 0.0
    %684 = vmatpush1.msra.mxu0 0.0
    %685 = vmatprep.subr.mxu0 0.0
    %686 = vmatpush1.msra.mxu0 0.0
    %687 = vmatprep.subr.mxu0 0.0
    %688 = vmatpush1.msra.mxu0 0.0
    %689 = vmatprep.subr.mxu0 0.0
    %690 = vmatpush1.msra.mxu0 0.0
    %691 = vmatprep.subr.mxu0 0.0
    %692 = vmatpush1.msra.mxu0 0.0
    %693 = vmatprep.subr.mxu0 0.0
    %694 = vmatpush1.msra.mxu0 0.0
    %695 = vmatprep.subr.mxu0 0.0
    %696 = vmatpush1.msra.mxu0 0.0
    %697 = vmatprep.subr.mxu0 0.0
    %698 = vmatpush1.msra.mxu0 0.0
    %699 = vmatprep.subr.mxu0 0.0
    %700 = vmatpush1.msra.mxu0 0.0
    %701 = vmatprep.subr.mxu0 0.0
    %702 = vmatpush1.msra.mxu0 0.0
    %703 = vmatprep.mubr.f32.mxu0 0.0
    %704 = vmatmul.mubr.f32.gmra.mrb[0].mxu0 %v637
    %v705 = vpop.f32.mrb[0].mxu0
    %v706 = vadd.f32 0.0, %v705
    %v707 = vpop.f32.mrb[0].mxu0
    %708 = vdwg.mxu0
    %710 = vset.pattern.permute.xlu0 0
    %711 = vperm.xlu0 %710, %v464
    %v712 = vpop.permute.xlu0 %711
    %v713 = vlaneseq
    %v714 = vshrl.u32 %v713, 7
    %v715 = vsub.s32 %v224, %v714
    %v716 = vrot.slane %v712, %v715
    %v717 = vsel %vm272, %v716, 0
    %719 = vmatprep.subr.mxu0 0.0
    %720 = vmatpush1.msra.mxu0 %v153
    %721 = vmatprep.subr.mxu0 0.0
    %722 = vmatpush1.msra.mxu0 0.0
    %723 = vmatprep.subr.mxu0 0.0
    %724 = vmatpush1.msra.mxu0 0.0
    %725 = vmatprep.subr.mxu0 0.0
    %726 = vmatpush1.msra.mxu0 0.0
    %727 = vmatprep.subr.mxu0 0.0
    %728 = vmatpush1.msra.mxu0 0.0
    %729 = vmatprep.subr.mxu0 0.0
    %730 = vmatpush1.msra.mxu0 0.0
    %731 = vmatprep.subr.mxu0 0.0
    %732 = vmatpush1.msra.mxu0 0.0
    %733 = vmatprep.subr.mxu0 0.0
    %734 = vmatpush1.msra.mxu0 0.0
    %735 = vmatprep.subr.mxu0 0.0
    %736 = vmatpush1.msra.mxu0 0.0
    %737 = vmatprep.subr.mxu0 0.0
    %738 = vmatpush1.msra.mxu0 0.0
    %739 = vmatprep.subr.mxu0 0.0
    %740 = vmatpush1.msra.mxu0 0.0
    %741 = vmatprep.subr.mxu0 0.0
    %742 = vmatpush1.msra.mxu0 0.0
    %743 = vmatprep.subr.mxu0 0.0
    %744 = vmatpush1.msra.mxu0 0.0
    %745 = vmatprep.subr.mxu0 0.0
    %746 = vmatpush1.msra.mxu0 0.0
    %747 = vmatprep.subr.mxu0 0.0
    %748 = vmatpush1.msra.mxu0 0.0
    %749 = vmatprep.subr.mxu0 0.0
    %750 = vmatpush1.msra.mxu0 0.0
    %751 = vmatprep.subr.mxu0 0.0
    %752 = vmatpush1.msra.mxu0 0.0
    %753 = vmatprep.subr.mxu0 0.0
    %754 = vmatpush1.msra.mxu0 0.0
    %755 = vmatprep.subr.mxu0 0.0
    %756 = vmatpush1.msra.mxu0 0.0
    %757 = vmatprep.subr.mxu0 0.0
    %758 = vmatpush1.msra.mxu0 0.0
    %759 = vmatprep.subr.mxu0 0.0
    %760 = vmatpush1.msra.mxu0 0.0
    %761 = vmatprep.subr.mxu0 0.0
    %762 = vmatpush1.msra.mxu0 0.0
    %763 = vmatprep.subr.mxu0 0.0
    %764 = vmatpush1.msra.mxu0 0.0
    %765 = vmatprep.subr.mxu0 0.0
    %766 = vmatpush1.msra.mxu0 0.0
    %767 = vmatprep.subr.mxu0 0.0
    %768 = vmatpush1.msra.mxu0 0.0
    %769 = vmatprep.subr.mxu0 0.0
    %770 = vmatpush1.msra.mxu0 0.0
    %771 = vmatprep.subr.mxu0 0.0
    %772 = vmatpush1.msra.mxu0 0.0
    %773 = vmatprep.subr.mxu0 0.0
    %774 = vmatpush1.msra.mxu0 0.0
    %775 = vmatprep.subr.mxu0 0.0
    %776 = vmatpush1.msra.mxu0 0.0
    %777 = vmatprep.subr.mxu0 0.0
    %778 = vmatpush1.msra.mxu0 0.0
    %779 = vmatprep.subr.mxu0 0.0
    %780 = vmatpush1.msra.mxu0 0.0
    %781 = vmatprep.subr.mxu0 0.0
    %782 = vmatpush1.msra.mxu0 0.0
    %783 = vmatprep.mubr.f32.mxu0 0.0
    %784 = vmatmul.mubr.f32.gmra.mrb[0].mxu0 %v717
    %v785 = vpop.f32.mrb[0].mxu0
    %v786 = vadd.f32 0.0, %v785
    %v787 = vpop.f32.mrb[0].mxu0
    %788 = vdwg.mxu0
    %790 = vset.pattern.permute.xlu0 0
    %791 = vperm.xlu0 %790, %v465
    %v792 = vpop.permute.xlu0 %791
    %v793 = vlaneseq
    %v794 = vshrl.u32 %v793, 7
    %v795 = vsub.s32 %v224, %v794
    %v796 = vrot.slane %v792, %v795
    %v797 = vsel %vm272, %v796, 0
    %799 = vmatprep.subr.mxu0 0.0
    %800 = vmatpush1.msra.mxu0 %v158
    %801 = vmatprep.subr.mxu0 0.0
    %802 = vmatpush1.msra.mxu0 0.0
    %803 = vmatprep.subr.mxu0 0.0
    %804 = vmatpush1.msra.mxu0 0.0
    %805 = vmatprep.subr.mxu0 0.0
    %806 = vmatpush1.msra.mxu0 0.0
    %807 = vmatprep.subr.mxu0 0.0
    %808 = vmatpush1.msra.mxu0 0.0
    %809 = vmatprep.subr.mxu0 0.0
    %810 = vmatpush1.msra.mxu0 0.0
    %811 = vmatprep.subr.mxu0 0.0
    %812 = vmatpush1.msra.mxu0 0.0
    %813 = vmatprep.subr.mxu0 0.0
    %814 = vmatpush1.msra.mxu0 0.0
    %815 = vmatprep.subr.mxu0 0.0
    %816 = vmatpush1.msra.mxu0 0.0
    %817 = vmatprep.subr.mxu0 0.0
    %818 = vmatpush1.msra.mxu0 0.0
    %819 = vmatprep.subr.mxu0 0.0
    %820 = vmatpush1.msra.mxu0 0.0
    %821 = vmatprep.subr.mxu0 0.0
    %822 = vmatpush1.msra.mxu0 0.0
    %823 = vmatprep.subr.mxu0 0.0
    %824 = vmatpush1.msra.mxu0 0.0
    %825 = vmatprep.subr.mxu0 0.0
    %826 = vmatpush1.msra.mxu0 0.0
    %827 = vmatprep.subr.mxu0 0.0
    %828 = vmatpush1.msra.mxu0 0.0
    %829 = vmatprep.subr.mxu0 0.0
    %830 = vmatpush1.msra.mxu0 0.0
    %831 = vmatprep.subr.mxu0 0.0
    %832 = vmatpush1.msra.mxu0 0.0
    %833 = vmatprep.subr.mxu0 0.0
    %834 = vmatpush1.msra.mxu0 0.0
    %835 = vmatprep.subr.mxu0 0.0
    %836 = vmatpush1.msra.mxu0 0.0
    %837 = vmatprep.subr.mxu0 0.0
    %838 = vmatpush1.msra.mxu0 0.0
    %839 = vmatprep.subr.mxu0 0.0
    %840 = vmatpush1.msra.mxu0 0.0
    %841 = vmatprep.subr.mxu0 0.0
    %842 = vmatpush1.msra.mxu0 0.0
    %843 = vmatprep.subr.mxu0 0.0
    %844 = vmatpush1.msra.mxu0 0.0
    %845 = vmatprep.subr.mxu0 0.0
    %846 = vmatpush1.msra.mxu0 0.0
    %847 = vmatprep.subr.mxu0 0.0
    %848 = vmatpush1.msra.mxu0 0.0
    %849 = vmatprep.subr.mxu0 0.0
    %850 = vmatpush1.msra.mxu0 0.0
    %851 = vmatprep.subr.mxu0 0.0
    %852 = vmatpush1.msra.mxu0 0.0
    %853 = vmatprep.subr.mxu0 0.0
    %854 = vmatpush1.msra.mxu0 0.0
    %855 = vmatprep.subr.mxu0 0.0
    %856 = vmatpush1.msra.mxu0 0.0
    %857 = vmatprep.subr.mxu0 0.0
    %858 = vmatpush1.msra.mxu0 0.0
    %859 = vmatprep.subr.mxu0 0.0
    %860 = vmatpush1.msra.mxu0 0.0
    %861 = vmatprep.subr.mxu0 0.0
    %862 = vmatpush1.msra.mxu0 0.0
    %863 = vmatprep.mubr.f32.mxu0 0.0
    %864 = vmatmul.mubr.f32.gmra.mrb[0].mxu0 %v797
    %v865 = vpop.f32.mrb[0].mxu0
    %v866 = vadd.f32 0.0, %v865
    %v867 = vpop.f32.mrb[0].mxu0
    %868 = vdwg.mxu0
    %870 = vset.pattern.permute.xlu0 0
    %871 = vperm.xlu0 %870, %v466
    %v872 = vpop.permute.xlu0 %871
    %v873 = vlaneseq
    %v874 = vshrl.u32 %v873, 7
    %v875 = vsub.s32 %v224, %v874
    %v876 = vrot.slane %v872, %v875
    %v877 = vsel %vm272, %v876, 0
    %879 = vmatprep.subr.mxu0 0.0
    %880 = vmatpush1.msra.mxu0 %v163
    %881 = vmatprep.subr.mxu0 0.0
    %882 = vmatpush1.msra.mxu0 0.0
    %883 = vmatprep.subr.mxu0 0.0
    %884 = vmatpush1.msra.mxu0 0.0
    %885 = vmatprep.subr.mxu0 0.0
    %886 = vmatpush1.msra.mxu0 0.0
    %887 = vmatprep.subr.mxu0 0.0
    %888 = vmatpush1.msra.mxu0 0.0
    %889 = vmatprep.subr.mxu0 0.0
    %890 = vmatpush1.msra.mxu0 0.0
    %891 = vmatprep.subr.mxu0 0.0
    %892 = vmatpush1.msra.mxu0 0.0
    %893 = vmatprep.subr.mxu0 0.0
    %894 = vmatpush1.msra.mxu0 0.0
    %895 = vmatprep.subr.mxu0 0.0
    %896 = vmatpush1.msra.mxu0 0.0
    %897 = vmatprep.subr.mxu0 0.0
    %898 = vmatpush1.msra.mxu0 0.0
    %899 = vmatprep.subr.mxu0 0.0
    %900 = vmatpush1.msra.mxu0 0.0
    %901 = vmatprep.subr.mxu0 0.0
    %902 = vmatpush1.msra.mxu0 0.0
    %903 = vmatprep.subr.mxu0 0.0
    %904 = vmatpush1.msra.mxu0 0.0
    %905 = vmatprep.subr.mxu0 0.0
    %906 = vmatpush1.msra.mxu0 0.0
    %907 = vmatprep.subr.mxu0 0.0
    %908 = vmatpush1.msra.mxu0 0.0
    %909 = vmatprep.subr.mxu0 0.0
    %910 = vmatpush1.msra.mxu0 0.0
    %911 = vmatprep.subr.mxu0 0.0
    %912 = vmatpush1.msra.mxu0 0.0
    %913 = vmatprep.subr.mxu0 0.0
    %914 = vmatpush1.msra.mxu0 0.0
    %915 = vmatprep.subr.mxu0 0.0
    %916 = vmatpush1.msra.mxu0 0.0
    %917 = vmatprep.subr.mxu0 0.0
    %918 = vmatpush1.msra.mxu0 0.0
    %919 = vmatprep.subr.mxu0 0.0
    %920 = vmatpush1.msra.mxu0 0.0
    %921 = vmatprep.subr.mxu0 0.0
    %922 = vmatpush1.msra.mxu0 0.0
    %923 = vmatprep.subr.mxu0 0.0
    %924 = vmatpush1.msra.mxu0 0.0
    %925 = vmatprep.subr.mxu0 0.0
    %926 = vmatpush1.msra.mxu0 0.0
    %927 = vmatprep.subr.mxu0 0.0
    %928 = vmatpush1.msra.mxu0 0.0
    %929 = vmatprep.subr.mxu0 0.0
    %930 = vmatpush1.msra.mxu0 0.0
    %931 = vmatprep.subr.mxu0 0.0
    %932 = vmatpush1.msra.mxu0 0.0
    %933 = vmatprep.subr.mxu0 0.0
    %934 = vmatpush1.msra.mxu0 0.0
    %935 = vmatprep.subr.mxu0 0.0
    %936 = vmatpush1.msra.mxu0 0.0
    %937 = vmatprep.subr.mxu0 0.0
    %938 = vmatpush1.msra.mxu0 0.0
    %939 = vmatprep.subr.mxu0 0.0
    %940 = vmatpush1.msra.mxu0 0.0
    %941 = vmatprep.subr.mxu0 0.0
    %942 = vmatpush1.msra.mxu0 0.0
    %943 = vmatprep.mubr.f32.mxu0 0.0
    %944 = vmatmul.mubr.f32.gmra.mrb[0].mxu0 %v877
    %v945 = vpop.f32.mrb[0].mxu0
    %v946 = vadd.f32 0.0, %v945
    %v947 = vpop.f32.mrb[0].mxu0
    %948 = vdwg.mxu0
    %950 = vset.pattern.permute.xlu0 0
    %951 = vperm.xlu0 %950, %v467
    %v952 = vpop.permute.xlu0 %951
    %v953 = vlaneseq
    %v954 = vshrl.u32 %v953, 7
    %v955 = vsub.s32 %v224, %v954
    %v956 = vrot.slane %v952, %v955
    %v957 = vsel %vm272, %v956, 0
    %959 = vmatprep.subr.mxu0 0.0
    %960 = vmatpush1.msra.mxu0 %v168
    %961 = vmatprep.subr.mxu0 0.0
    %962 = vmatpush1.msra.mxu0 0.0
    %963 = vmatprep.subr.mxu0 0.0
    %964 = vmatpush1.msra.mxu0 0.0
    %965 = vmatprep.subr.mxu0 0.0
    %966 = vmatpush1.msra.mxu0 0.0
    %967 = vmatprep.subr.mxu0 0.0
    %968 = vmatpush1.msra.mxu0 0.0
    %969 = vmatprep.subr.mxu0 0.0
    %970 = vmatpush1.msra.mxu0 0.0
    %971 = vmatprep.subr.mxu0 0.0
    %972 = vmatpush1.msra.mxu0 0.0
    %973 = vmatprep.subr.mxu0 0.0
    %974 = vmatpush1.msra.mxu0 0.0
    %975 = vmatprep.subr.mxu0 0.0
    %976 = vmatpush1.msra.mxu0 0.0
    %977 = vmatprep.subr.mxu0 0.0
    %978 = vmatpush1.msra.mxu0 0.0
    %979 = vmatprep.subr.mxu0 0.0
    %980 = vmatpush1.msra.mxu0 0.0
    %981 = vmatprep.subr.mxu0 0.0
    %982 = vmatpush1.msra.mxu0 0.0
    %983 = vmatprep.subr.mxu0 0.0
    %984 = vmatpush1.msra.mxu0 0.0
    %985 = vmatprep.subr.mxu0 0.0
    %986 = vmatpush1.msra.mxu0 0.0
    %987 = vmatprep.subr.mxu0 0.0
    %988 = vmatpush1.msra.mxu0 0.0
    %989 = vmatprep.subr.mxu0 0.0
    %990 = vmatpush1.msra.mxu0 0.0
    %991 = vmatprep.subr.mxu0 0.0
    %992 = vmatpush1.msra.mxu0 0.0
    %993 = vmatprep.subr.mxu0 0.0
    %994 = vmatpush1.msra.mxu0 0.0
    %995 = vmatprep.subr.mxu0 0.0
    %996 = vmatpush1.msra.mxu0 0.0
    %997 = vmatprep.subr.mxu0 0.0
    %998 = vmatpush1.msra.mxu0 0.0
    %999 = vmatprep.subr.mxu0 0.0
    %1000 = vmatpush1.msra.mxu0 0.0
    %1001 = vmatprep.subr.mxu0 0.0
    %1002 = vmatpush1.msra.mxu0 0.0
    %1003 = vmatprep.subr.mxu0 0.0
    %1004 = vmatpush1.msra.mxu0 0.0
    %1005 = vmatprep.subr.mxu0 0.0
    %1006 = vmatpush1.msra.mxu0 0.0
    %1007 = vmatprep.subr.mxu0 0.0
    %1008 = vmatpush1.msra.mxu0 0.0
    %1009 = vmatprep.subr.mxu0 0.0
    %1010 = vmatpush1.msra.mxu0 0.0
    %1011 = vmatprep.subr.mxu0 0.0
    %1012 = vmatpush1.msra.mxu0 0.0
    %1013 = vmatprep.subr.mxu0 0.0
    %1014 = vmatpush1.msra.mxu0 0.0
    %1015 = vmatprep.subr.mxu0 0.0
    %1016 = vmatpush1.msra.mxu0 0.0
    %1017 = vmatprep.subr.mxu0 0.0
    %1018 = vmatpush1.msra.mxu0 0.0
    %1019 = vmatprep.subr.mxu0 0.0
    %1020 = vmatpush1.msra.mxu0 0.0
    %1021 = vmatprep.subr.mxu0 0.0
    %1022 = vmatpush1.msra.mxu0 0.0
    %1023 = vmatprep.mubr.f32.mxu0 0.0
    %1024 = vmatmul.mubr.f32.gmra.mrb[0].mxu0 %v957
    %v1025 = vpop.f32.mrb[0].mxu0
    %v1026 = vadd.f32 0.0, %v1025
    %v1027 = vpop.f32.mrb[0].mxu0
    %1028 = vdwg.mxu0
    %1030 = vset.pattern.permute.xlu0 0
    %1031 = vperm.xlu0 %1030, %v468
    %v1032 = vpop.permute.xlu0 %1031
    %v1033 = vlaneseq
    %v1034 = vshrl.u32 %v1033, 7
    %v1035 = vsub.s32 %v224, %v1034
    %v1036 = vrot.slane %v1032, %v1035
    %v1037 = vsel %vm272, %v1036, 0
    %1039 = vmatprep.subr.mxu0 0.0
    %1040 = vmatpush1.msra.mxu0 %v173
    %1041 = vmatprep.subr.mxu0 0.0
    %1042 = vmatpush1.msra.mxu0 0.0
    %1043 = vmatprep.subr.mxu0 0.0
    %1044 = vmatpush1.msra.mxu0 0.0
    %1045 = vmatprep.subr.mxu0 0.0
    %1046 = vmatpush1.msra.mxu0 0.0
    %1047 = vmatprep.subr.mxu0 0.0
    %1048 = vmatpush1.msra.mxu0 0.0
    %1049 = vmatprep.subr.mxu0 0.0
    %1050 = vmatpush1.msra.mxu0 0.0
    %1051 = vmatprep.subr.mxu0 0.0
    %1052 = vmatpush1.msra.mxu0 0.0
    %1053 = vmatprep.subr.mxu0 0.0
    %1054 = vmatpush1.msra.mxu0 0.0
    %1055 = vmatprep.subr.mxu0 0.0
    %1056 = vmatpush1.msra.mxu0 0.0
    %1057 = vmatprep.subr.mxu0 0.0
    %1058 = vmatpush1.msra.mxu0 0.0
    %1059 = vmatprep.subr.mxu0 0.0
    %1060 = vmatpush1.msra.mxu0 0.0
    %1061 = vmatprep.subr.mxu0 0.0
    %1062 = vmatpush1.msra.mxu0 0.0
    %1063 = vmatprep.subr.mxu0 0.0
    %1064 = vmatpush1.msra.mxu0 0.0
    %1065 = vmatprep.subr.mxu0 0.0
    %1066 = vmatpush1.msra.mxu0 0.0
    %1067 = vmatprep.subr.mxu0 0.0
    %1068 = vmatpush1.msra.mxu0 0.0
    %1069 = vmatprep.subr.mxu0 0.0
    %1070 = vmatpush1.msra.mxu0 0.0
    %1071 = vmatprep.subr.mxu0 0.0
    %1072 = vmatpush1.msra.mxu0 0.0
    %1073 = vmatprep.subr.mxu0 0.0
    %1074 = vmatpush1.msra.mxu0 0.0
    %1075 = vmatprep.subr.mxu0 0.0
    %1076 = vmatpush1.msra.mxu0 0.0
    %1077 = vmatprep.subr.mxu0 0.0
    %1078 = vmatpush1.msra.mxu0 0.0
    %1079 = vmatprep.subr.mxu0 0.0
    %1080 = vmatpush1.msra.mxu0 0.0
    %1081 = vmatprep.subr.mxu0 0.0
    %1082 = vmatpush1.msra.mxu0 0.0
    %1083 = vmatprep.subr.mxu0 0.0
    %1084 = vmatpush1.msra.mxu0 0.0
    %1085 = vmatprep.subr.mxu0 0.0
    %1086 = vmatpush1.msra.mxu0 0.0
    %1087 = vmatprep.subr.mxu0 0.0
    %1088 = vmatpush1.msra.mxu0 0.0
    %1089 = vmatprep.subr.mxu0 0.0
    %1090 = vmatpush1.msra.mxu0 0.0
    %1091 = vmatprep.subr.mxu0 0.0
    %1092 = vmatpush1.msra.mxu0 0.0
    %1093 = vmatprep.subr.mxu0 0.0
    %1094 = vmatpush1.msra.mxu0 0.0
    %1095 = vmatprep.subr.mxu0 0.0
    %1096 = vmatpush1.msra.mxu0 0.0
    %1097 = vmatprep.subr.mxu0 0.0
    %1098 = vmatpush1.msra.mxu0 0.0
    %1099 = vmatprep.subr.mxu0 0.0
    %1100 = vmatpush1.msra.mxu0 0.0
    %1101 = vmatprep.subr.mxu0 0.0
    %1102 = vmatpush1.msra.mxu0 0.0
    %1103 = vmatprep.mubr.f32.mxu0 0.0
    %1104 = vmatmul.mubr.f32.gmra.mrb[0].mxu0 %v1037
    %v1105 = vpop.f32.mrb[0].mxu0
    %v1106 = vadd.f32 0.0, %v1105
    %v1107 = vpop.f32.mrb[0].mxu0
    %1108 = vdwg.mxu0
    %v1109 = vld [vmem:[%s4] sm:$0xff]
    %v1110 = vld [vmem:[%s4 + $0x8] sm:$0xff]
    %v1111 = vld [vmem:[%s4 + $0x10] sm:$0xff]
    %v1112 = vld [vmem:[%s4 + $0x18] sm:$0xff]
    %v1113 = vld [vmem:[%s5] sm:$0x1]
    %v1115 = vlaneseq
    %v1116 = vshrl.u32 %v1115, 7
    %v1117 = vsub.s32 0, %v1116
    %v1118 = vrot.slane %v1113, %v1117
    %v1128 = vrot.slane %v626, 7
    %v1129 = vsel %vm257, %v1128, %v546
    %v1130 = vrot.slane %v706, 6
    %v1131 = vsel %vm259, %v1130, %v1129
    %v1132 = vrot.slane %v786, 5
    %v1133 = vsel %vm261, %v1132, %v1131
    %v1134 = vrot.slane %v866, 4
    %v1135 = vsel %vm263, %v1134, %v1133
    %v1136 = vrot.slane %v946, 3
    %v1137 = vsel %vm265, %v1136, %v1135
    %v1138 = vrot.slane %v1026, 2
    %v1139 = vsel %vm267, %v1138, %v1137
    %v1140 = vrot.slane %v1106, 1
    %v1141 = vsel %vm269, %v1140, %v1139
    %v1142 = vsel %vm46, %v1141, 0
    %1144 = vmatprep.subr.mxu0 0.0
    %1145 = vmatpush1.msra.mxu0 %v1109
    %1146 = vmatprep.subr.mxu0 0.0
    %1147 = vmatpush1.msra.mxu0 %v1110
    %1148 = vmatprep.subr.mxu0 0.0
    %1149 = vmatpush1.msra.mxu0 %v1111
    %1150 = vmatprep.subr.mxu0 0.0
    %1151 = vmatpush1.msra.mxu0 %v1112
    %1152 = vmatprep.subr.mxu0 0.0
    %1153 = vmatpush1.msra.mxu0 0.0
    %1154 = vmatprep.subr.mxu0 0.0
    %1155 = vmatpush1.msra.mxu0 0.0
    %1156 = vmatprep.subr.mxu0 0.0
    %1157 = vmatpush1.msra.mxu0 0.0
    %1158 = vmatprep.subr.mxu0 0.0
    %1159 = vmatpush1.msra.mxu0 0.0
    %1160 = vmatprep.subr.mxu0 0.0
    %1161 = vmatpush1.msra.mxu0 0.0
    %1162 = vmatprep.subr.mxu0 0.0
    %1163 = vmatpush1.msra.mxu0 0.0
    %1164 = vmatprep.subr.mxu0 0.0
    %1165 = vmatpush1.msra.mxu0 0.0
    %1166 = vmatprep.subr.mxu0 0.0
    %1167 = vmatpush1.msra.mxu0 0.0
    %1168 = vmatprep.subr.mxu0 0.0
    %1169 = vmatpush1.msra.mxu0 0.0
    %1170 = vmatprep.subr.mxu0 0.0
    %1171 = vmatpush1.msra.mxu0 0.0
    %1172 = vmatprep.subr.mxu0 0.0
    %1173 = vmatpush1.msra.mxu0 0.0
    %1174 = vmatprep.subr.mxu0 0.0
    %1175 = vmatpush1.msra.mxu0 0.0
    %1176 = vmatprep.subr.mxu0 0.0
    %1177 = vmatpush1.msra.mxu0 0.0
    %1178 = vmatprep.subr.mxu0 0.0
    %1179 = vmatpush1.msra.mxu0 0.0
    %1180 = vmatprep.subr.mxu0 0.0
    %1181 = vmatpush1.msra.mxu0 0.0
    %1182 = vmatprep.subr.mxu0 0.0
    %1183 = vmatpush1.msra.mxu0 0.0
    %1184 = vmatprep.subr.mxu0 0.0
    %1185 = vmatpush1.msra.mxu0 0.0
    %1186 = vmatprep.subr.mxu0 0.0
    %1187 = vmatpush1.msra.mxu0 0.0
    %1188 = vmatprep.subr.mxu0 0.0
    %1189 = vmatpush1.msra.mxu0 0.0
    %1190 = vmatprep.subr.mxu0 0.0
    %1191 = vmatpush1.msra.mxu0 0.0
    %1192 = vmatprep.subr.mxu0 0.0
    %1193 = vmatpush1.msra.mxu0 0.0
    %1194 = vmatprep.subr.mxu0 0.0
    %1195 = vmatpush1.msra.mxu0 0.0
    %1196 = vmatprep.subr.mxu0 0.0
    %1197 = vmatpush1.msra.mxu0 0.0
    %1198 = vmatprep.subr.mxu0 0.0
    %1199 = vmatpush1.msra.mxu0 0.0
    %1200 = vmatprep.subr.mxu0 0.0
    %1201 = vmatpush1.msra.mxu0 0.0
    %1202 = vmatprep.subr.mxu0 0.0
    %1203 = vmatpush1.msra.mxu0 0.0
    %1204 = vmatprep.subr.mxu0 0.0
    %1205 = vmatpush1.msra.mxu0 0.0
    %1206 = vmatprep.subr.mxu0 0.0
    %1207 = vmatpush1.msra.mxu0 0.0
    %1208 = vmatprep.mubr.f32.mxu0 0.0
    %1209 = vmatmul.mubr.f32.gmra.mrb[0].mxu0 %v1142
    %v1210 = vpop.f32.mrb[0].mxu0
    %v1211 = vadd.f32 %v1118, %v1210
    %v1212 = vpop.f32.mrb[0].mxu0
    %1213 = vdwg.mxu0
    %1214 = vst.msk [vmem:[#allocation2] sm:$0xff] %vm46, %v1211
    %v1215 = vsel %vm257, %v556, %v476
    %v1216 = vsel %vm259, %v636, %v1215
    %v1217 = vsel %vm261, %v716, %v1216
    %v1218 = vsel %vm263, %v796, %v1217
    %v1219 = vsel %vm265, %v876, %v1218
    %v1220 = vsel %vm267, %v956, %v1219
    %v1221 = vsel %vm269, %v1036, %v1220
    %1223 = vst.msk [vmem:[#allocation4] sm:$0xff] %vm272, %v1221
    // Predicated region
    $region26: #{tpu_custom_call.1} parent=1 // pred_check
      _
    $region27: #{tpu_custom_call.1} parent=1 // pred_check_branch
      %1225 = sbr.rel (0) target = $region29
    $region28: #{tpu_custom_call.1} parent=1 // pred_region
      %s1227 = ssub.s32 128, 128
      %1228 = vsyncadd [#allocation3], %s1227
      %s1230 = sshll.u32 [#allocation2], 4
      %s1231 = int_to_ptr.vmem [resolvable:$true] %s1230
      %1233 = dma.vmem_to_hbm [thread:$0]  %s1231, 128, %s6, [#allocation3]
    $region29: #{tpu_custom_call.1} parent=1 // pred_fallthru
      _
    // Predicated region
    $region30: #{tpu_custom_call.1} parent=1 // pred_check
      _
    $region31: #{tpu_custom_call.1} parent=1 // pred_check_branch
      %1235 = sbr.rel (0) target = $region33
    $region32: #{tpu_custom_call.1} parent=1 // pred_region
      %s1237 = ssub.s32 128, 128
      %1238 = vsyncadd [#allocation5], %s1237
      %s1240 = sshll.u32 [#allocation4], 4
      %s1241 = int_to_ptr.vmem [resolvable:$true] %s1240
      %1243 = dma.vmem_to_hbm [thread:$0]  %s1241, 128, %s7, [#allocation5]
    $region33: #{tpu_custom_call.1} parent=1 // pred_fallthru
      _
    // Predicated region
    $region34: #{tpu_custom_call.1} parent=1 // pred_check
      _
    $region35: #{tpu_custom_call.1} parent=1 // pred_check_branch
      %1245 = sbr.rel (0) target = $region37
    $region36: #{tpu_custom_call.1} parent=1 // pred_region
      %1246 = dma.done [#allocation3], 128
    $region37: #{tpu_custom_call.1} parent=1 // pred_fallthru
      _
    // Predicated region
    $region38: #{tpu_custom_call.1} parent=1 // pred_check
      _
    $region39: #{tpu_custom_call.1} parent=1 // pred_check_branch
      %1248 = sbr.rel (0) target = $region41
    $region40: #{tpu_custom_call.1} parent=1 // pred_region
      %1249 = dma.done [#allocation5], 128
    $region41: #{tpu_custom_call.1} parent=1 // pred_fallthru
      _
    %1250 = vsyncpa [#allocation3], 1
    %1251 = vsyncpa [#allocation5], 1

</llo_original>
